<compile_context>
chip_gen: v7x
topology: tpu7x:2x2x1
jax: 0.10.0
libtpu: 0.0.40
codegen_flags: <defaults>
</compile_context>

<pallas_src>
import functools

import jax
import jax.numpy as jnp
from jax.experimental import pallas as pl
from jax.experimental.pallas import tpu as pltpu

SUBLANE = 8


def _cdiv(a, b):
    return -(-a // b)


def _round_up(x, m):
    return _cdiv(x, m) * m


def _vmem_capacity_bytes():
    """Physical per-core VMEM, generation-aware (64 MiB on v7x, 128 MiB on v5e/v6e)."""
    try:
        return int(pltpu.get_tpu_info().vmem_capacity_bytes)
    except Exception:
        try:
            kind = jax.devices()[0].device_kind.lower()
        except Exception:
            kind = ""
        if "v7" in kind:
            return 64 << 20
        return 128 << 20


def _fused_mlp_kernel(*refs, num_layers):
    # refs = (x_ref, w1, b1, w2, b2, ..., wL, bL, o_ref); weights are bf16, biases f32.
    x_ref = refs[0]
    o_ref = refs[-1]
    h = x_ref[...].astype(jnp.bfloat16)  # bf16 is the native MXU input path on all generations
    for i in range(num_layers):
        w_ref = refs[1 + 2 * i]
        b_ref = refs[2 + 2 * i]
        acc = jnp.dot(h, w_ref[...], preferred_element_type=jnp.float32)
        acc = acc + b_ref[...]  # f32 epilogue on the VPU (v5e has no bf16 VALU)
        if i < num_layers - 1:
            h = jnp.maximum(acc, 0.0).astype(jnp.bfloat16)  # ReLU in f32, re-narrow for next MXU pass
        else:
            h = acc
    o_ref[...] = h.astype(o_ref.dtype)


def pack_mlp_params(params):
    """One-time packing (keep outside the per-call hot path): w -> bf16 (in,out), b -> f32 (1,out).

    `params` is a list of (w, b) with w stored (in_dim, out_dim), i.e. PyTorch nn.Linear weight.T,
    so the kernel computes y = x @ w + b == x @ W_pt.T + b_pt.
    """
    packed = []
    for w, b in params:
        packed.append((jnp.asarray(w, jnp.bfloat16),
                       jnp.asarray(b, jnp.float32).reshape(1, -1)))
    return packed


def _vmem_bytes(tm, dims, weights_buffered):
    """Conservative VMEM estimate: double-buffered x/out row tiles, resident weights/biases, and
    BOTH live activation tiles (bf16 input + f32 output) of the widest layer."""
    wmult = 1 if weights_buffered else 2
    w_bytes = wmult * sum(di * do * 2 + do * 4 for di, do in zip(dims[:-1], dims[1:]))
    io_bytes = 2 * tm * dims[0] * 4 + 2 * tm * dims[-1] * 4
    act_bytes = max(tm * (di * 2 + do * 4) for di, do in zip(dims[:-1], dims[1:]))
    return w_bytes + io_bytes + act_bytes


def mlp_forward(x, packed_params, *, max_tm=1024):
    """Fused MLP forward. x: (..., in_dim) float. packed_params from pack_mlp_params()."""
    num_layers = len(packed_params)
    dims = [packed_params[0][0].shape[0]] + [w.shape[1] for w, _ in packed_params]
    in_dim, out_dim = dims[0], dims[-1]
    assert x.shape[-1] == in_dim

    lead = x.shape[:-1]
    x2d = x.reshape(-1, in_dim)
    M = x2d.shape[0]

    cap = _vmem_capacity_bytes()
    budget = cap - (16 << 20)  # headroom for compiler-internal scratch / semaphores

    # Largest row tile that fits the per-generation VMEM budget (mem-bound regime: bigger tiles
    # amortize the ~0.35us per-grid-step overhead).
    tm = None
    for cand in (1024, 512, 256, 128, 64, 32, 16, 8):
        if cand <= max_tm and _vmem_bytes(cand, dims, True) <= budget:
            tm = cand
            break
    if tm is None:
        # TODO(synk): K/N-tiled accumulator fallback for weight stacks that exceed VMEM.
        raise NotImplementedError("MLP weights too large for the whole-weight-resident kernel")

    # Small M: force >=2 grid steps so the 'parallel' axis can be sharded across both v7x TCs.
    m_pad8 = _round_up(M, SUBLANE)
    if m_pad8 <= tm:
        tm_eff = _round_up(_cdiv(m_pad8, 2), SUBLANE) if m_pad8 >= 2 * SUBLANE else m_pad8
    else:
        tm_eff = tm
    grid = (_cdiv(M, tm_eff),)

    flat = []
    for w, b in packed_params:
        flat += [w, b]

    def build(weights_buffered):
        # x / out are tiled over M only; weights & biases are whole-array VMEM-resident blocks.
        in_specs = [pl.BlockSpec((tm_eff, in_dim), lambda i: (i, 0))]
        for l in range(num_layers):
            di, do = dims[l], dims[l + 1]
            if weights_buffered:
                in_specs.append(pl.BlockSpec((di, do), lambda i: (0, 0),
                                             pipeline_mode=pl.Buffered(1)))
                in_specs.append(pl.BlockSpec((1, do), lambda i: (0, 0),
                                             pipeline_mode=pl.Buffered(1)))
            else:
                in_specs.append(pl.BlockSpec((di, do), lambda i: (0, 0)))
                in_specs.append(pl.BlockSpec((1, do), lambda i: (0, 0)))
        # Output stays at the real out_dim (no 8x lane over-padding, no trailing slice kernel);
        # the masked vst is compute-side and the kernel is HBM-bound at these shapes.
        out_specs = pl.BlockSpec((tm_eff, out_dim), lambda i: (i, 0))

        est = _vmem_bytes(tm_eff, dims, weights_buffered)
        vmem_limit = None
        if est > (14 << 20):  # above v5e's 16 MiB default scoped limit (with slack)
            vmem_limit = int(min(cap - (4 << 20), est + (16 << 20)))

        kernel = functools.partial(_fused_mlp_kernel, num_layers=num_layers)
        return pl.pallas_call(
            kernel,
            out_shape=jax.ShapeDtypeStruct((M, out_dim), x.dtype),
            grid_spec=pl.GridSpec(grid=grid, in_specs=in_specs, out_specs=out_specs),
            compiler_params=pltpu.CompilerParams(
                dimension_semantics=("parallel",),
                vmem_limit_bytes=vmem_limit,
            ),
        )

    last_err = None
    for buffered in (True, False):  # fall back if this jax version rejects pipeline_mode
        try:
            y2d = build(buffered)(x2d, *flat)
            return y2d.reshape(*lead, out_dim)
        except Exception as e:  # noqa: BLE001 - a genuine error re-raises from the fallback path
            last_err = e
    raise last_err


def init_mlp_params(key, in_dim, hidden_dim, out_dim, num_layers):
    """Deterministic synthetic params. w stored as (in, out) == PyTorch nn.Linear weight.T."""
    h = [hidden_dim] * (num_layers - 1)
    dims_in = [in_dim] + h
    dims_out = h + [out_dim]
    params = []
    for di, do in zip(dims_in, dims_out):
        kw, kb, key = jax.random.split(key, 3)
        bound = 1.0 / float(di) ** 0.5  # PyTorch default Linear init bound
        w = jax.random.uniform(kw, (di, do), jnp.float32, -bound, bound)
        b = jax.random.uniform(kb, (do,), jnp.float32, -bound, bound)
        params.append((w, b))
    return params


def mlp_reference(x, params):
    num_layers = len(params)
    for i, (w, b) in enumerate(params):
        x = jnp.dot(x, w, preferred_element_type=jnp.float32) + b
        if i < num_layers - 1:
            x = jnp.maximum(x, 0.0)
    return x


if __name__ == "__main__":
    key = jax.random.PRNGKey(0)
    kx, kp = jax.random.split(key)

    # Small shapes consistent with the module: MLP(in_dim=32, hidden=64, out=16, num_layers=3)
    M, in_dim, hidden_dim, out_dim, num_layers = 16, 32, 64, 16, 3
    x = jax.random.normal(kx, (M, in_dim), jnp.float32)
    params = init_mlp_params(kp, in_dim, hidden_dim, out_dim, num_layers)
    packed = pack_mlp_params(params)  # one-time bf16 packing, outside the per-call path

    y = jax.block_until_ready(mlp_forward(x, packed))
    y_ref = mlp_reference(x, params)
    assert y.shape == (M, out_dim)
    # bf16 MXU inputs (f32 accumulation) -> not bit-identical to the f32 reference.
    assert jnp.allclose(y, y_ref, atol=5e-2, rtol=5e-2), float(jnp.max(jnp.abs(y - y_ref)))

    # Also exercise the multi-grid-step, non-multiple-of-tile M path.
    M2 = 777
    x2 = jax.random.normal(kx, (M2, in_dim), jnp.float32)
    y2 = jax.block_until_ready(mlp_forward(x2, packed))
    y2_ref = mlp_reference(x2, params)
    assert y2.shape == (M2, out_dim)
    assert jnp.allclose(y2, y2_ref, atol=5e-2, rtol=5e-2), float(jnp.max(jnp.abs(y2 - y2_ref)))

    print("KERNEL_OK")
</pallas_src>

<mosaic_0001>
module attributes {stable_mosaic.version = 11 : i64} {
  func.func @_fused_mlp_kernel(%arg0: i32, %arg1: memref<8x32xf32, #tpu.memory_space<vmem>>, %arg2: memref<32x64xbf16, #tpu.memory_space<vmem>>, %arg3: memref<1x64xf32, #tpu.memory_space<vmem>>, %arg4: memref<64x64xbf16, #tpu.memory_space<vmem>>, %arg5: memref<1x64xf32, #tpu.memory_space<vmem>>, %arg6: memref<64x16xbf16, #tpu.memory_space<vmem>>, %arg7: memref<1x16xf32, #tpu.memory_space<vmem>>, %arg8: memref<8x16xf32, #tpu.memory_space<vmem>>) attributes {dimension_semantics = [#tpu.dimension_semantics<parallel>], iteration_bounds = array<i64: 2>, scalar_prefetch = 0 : i64, scratch_operands = 0 : i64, tpu.core_type = #tpu.core_type<tc>, window_params = [{transform_indices = @transform_0, window_bounds = array<i64: 8, 32>}, {pipeline_mode = #tpu.pipeline_mode<synchronous>, transform_indices = @transform_1, window_bounds = array<i64: 32, 64>}, {pipeline_mode = #tpu.pipeline_mode<synchronous>, transform_indices = @transform_2, window_bounds = array<i64: 1, 64>}, {pipeline_mode = #tpu.pipeline_mode<synchronous>, transform_indices = @transform_3, window_bounds = array<i64: 64, 64>}, {pipeline_mode = #tpu.pipeline_mode<synchronous>, transform_indices = @transform_4, window_bounds = array<i64: 1, 64>}, {pipeline_mode = #tpu.pipeline_mode<synchronous>, transform_indices = @transform_5, window_bounds = array<i64: 64, 16>}, {pipeline_mode = #tpu.pipeline_mode<synchronous>, transform_indices = @transform_6, window_bounds = array<i64: 1, 16>}, {transform_indices = @transform_7, window_bounds = array<i64: 8, 16>}]} {
    %c0 = arith.constant 0 : index
    %c0_0 = arith.constant 0 : index
    %0 = vector.load %arg1[%c0, %c0_0] : memref<8x32xf32, #tpu.memory_space<vmem>>, vector<8x32xf32>
    %1 = arith.truncf %0 : vector<8x32xf32> to vector<8x32xbf16>
    %c0_1 = arith.constant 0 : index
    %c0_2 = arith.constant 0 : index
    %2 = vector.load %arg2[%c0_1, %c0_2] : memref<32x64xbf16, #tpu.memory_space<vmem>>, vector<32x64xbf16>
    %cst = arith.constant dense<0.000000e+00> : vector<8x64xf32>
    %3 = tpu.matmul %1, %2, %cst {dimension_numbers = #tpu.dot_dimension_numbers<[1], [0], [0], [1], [0, 0, 1, 1], [], []>} : vector<8x32xbf16>, vector<32x64xbf16>, vector<8x64xf32> -> vector<8x64xf32>
    %c0_3 = arith.constant 0 : index
    %c0_4 = arith.constant 0 : index
    %4 = vector.load %arg3[%c0_3, %c0_4] : memref<1x64xf32, #tpu.memory_space<vmem>>, vector<1x64xf32>
    %5 = vector.broadcast %4 : vector<1x64xf32> to vector<8x64xf32>
    %6 = arith.addf %3, %5 : vector<8x64xf32>
    %cst_5 = arith.constant 0.000000e+00 : f32
    %7 = vector.broadcast %cst_5 : f32 to vector<8x64xf32>
    %8 = arith.maximumf %6, %7 : vector<8x64xf32>
    %9 = arith.truncf %8 : vector<8x64xf32> to vector<8x64xbf16>
    %c0_6 = arith.constant 0 : index
    %c0_7 = arith.constant 0 : index
    %10 = vector.load %arg4[%c0_6, %c0_7] : memref<64x64xbf16, #tpu.memory_space<vmem>>, vector<64x64xbf16>
    %cst_8 = arith.constant dense<0.000000e+00> : vector<8x64xf32>
    %11 = tpu.matmul %9, %10, %cst_8 {dimension_numbers = #tpu.dot_dimension_numbers<[1], [0], [0], [1], [0, 0, 1, 1], [], []>} : vector<8x64xbf16>, vector<64x64xbf16>, vector<8x64xf32> -> vector<8x64xf32>
    %c0_9 = arith.constant 0 : index
    %c0_10 = arith.constant 0 : index
    %12 = vector.load %arg5[%c0_9, %c0_10] : memref<1x64xf32, #tpu.memory_space<vmem>>, vector<1x64xf32>
    %13 = vector.broadcast %12 : vector<1x64xf32> to vector<8x64xf32>
    %14 = arith.addf %11, %13 : vector<8x64xf32>
    %cst_11 = arith.constant 0.000000e+00 : f32
    %15 = vector.broadcast %cst_11 : f32 to vector<8x64xf32>
    %16 = arith.maximumf %14, %15 : vector<8x64xf32>
    %17 = arith.truncf %16 : vector<8x64xf32> to vector<8x64xbf16>
    %c0_12 = arith.constant 0 : index
    %c0_13 = arith.constant 0 : index
    %18 = vector.load %arg6[%c0_12, %c0_13] : memref<64x16xbf16, #tpu.memory_space<vmem>>, vector<64x16xbf16>
    %cst_14 = arith.constant dense<0.000000e+00> : vector<8x16xf32>
    %19 = tpu.matmul %17, %18, %cst_14 {dimension_numbers = #tpu.dot_dimension_numbers<[1], [0], [0], [1], [0, 0, 1, 1], [], []>} : vector<8x64xbf16>, vector<64x16xbf16>, vector<8x16xf32> -> vector<8x16xf32>
    %c0_15 = arith.constant 0 : index
    %c0_16 = arith.constant 0 : index
    %20 = vector.load %arg7[%c0_15, %c0_16] : memref<1x16xf32, #tpu.memory_space<vmem>>, vector<1x16xf32>
    %21 = vector.broadcast %20 : vector<1x16xf32> to vector<8x16xf32>
    %22 = arith.addf %19, %21 : vector<8x16xf32>
    %c0_17 = arith.constant 0 : index
    %c0_18 = arith.constant 0 : index
    %23 = vector.load %arg8[%c0_17, %c0_18] : memref<8x16xf32, #tpu.memory_space<vmem>>, vector<8x16xf32>
    tpu.vector_store %arg8[%c0_17, %c0_18], %22 {strides = array<i32>} : memref<8x16xf32, #tpu.memory_space<vmem>>, vector<8x16xf32>,
    return
  }
  func.func @transform_0(%arg0: i32) -> (i32, i32) {
    %c0_i32 = arith.constant 0 : i32
    %c0_i32_0 = arith.constant 0 : i32
    return %arg0, %c0_i32 : i32, i32
  }
  func.func @transform_1(%arg0: i32) -> (i32, i32) {
    %c0_i32 = arith.constant 0 : i32
    %c0_i32_0 = arith.constant 0 : i32
    %c0_i32_1 = arith.constant 0 : i32
    return %c0_i32, %c0_i32_0 : i32, i32
  }
  func.func @transform_2(%arg0: i32) -> (i32, i32) {
    %c0_i32 = arith.constant 0 : i32
    %c0_i32_0 = arith.constant 0 : i32
    %c0_i32_1 = arith.constant 0 : i32
    return %c0_i32, %c0_i32_0 : i32, i32
  }
  func.func @transform_3(%arg0: i32) -> (i32, i32) {
    %c0_i32 = arith.constant 0 : i32
    %c0_i32_0 = arith.constant 0 : i32
    %c0_i32_1 = arith.constant 0 : i32
    return %c0_i32, %c0_i32_0 : i32, i32
  }
  func.func @transform_4(%arg0: i32) -> (i32, i32) {
    %c0_i32 = arith.constant 0 : i32
    %c0_i32_0 = arith.constant 0 : i32
    %c0_i32_1 = arith.constant 0 : i32
    return %c0_i32, %c0_i32_0 : i32, i32
  }
  func.func @transform_5(%arg0: i32) -> (i32, i32) {
    %c0_i32 = arith.constant 0 : i32
    %c0_i32_0 = arith.constant 0 : i32
    %c0_i32_1 = arith.constant 0 : i32
    return %c0_i32, %c0_i32_0 : i32, i32
  }
  func.func @transform_6(%arg0: i32) -> (i32, i32) {
    %c0_i32 = arith.constant 0 : i32
    %c0_i32_0 = arith.constant 0 : i32
    %c0_i32_1 = arith.constant 0 : i32
    return %c0_i32, %c0_i32_0 : i32, i32
  }
  func.func @transform_7(%arg0: i32) -> (i32, i32) {
    %c0_i32 = arith.constant 0 : i32
    %c0_i32_0 = arith.constant 0 : i32
    return %arg0, %c0_i32 : i32, i32
  }
}

module attributes {stable_mosaic.version = 11 : i64} {
  func.func @_fused_mlp_kernel(%arg0: i32, %arg1: memref<8x32xf32, #tpu.memory_space<vmem>>, %arg2: memref<32x64xbf16, #tpu.memory_space<vmem>>, %arg3: memref<1x64xf32, #tpu.memory_space<vmem>>, %arg4: memref<64x64xbf16, #tpu.memory_space<vmem>>, %arg5: memref<1x64xf32, #tpu.memory_space<vmem>>, %arg6: memref<64x16xbf16, #tpu.memory_space<vmem>>, %arg7: memref<1x16xf32, #tpu.memory_space<vmem>>, %arg8: memref<8x16xf32, #tpu.memory_space<vmem>>) attributes {dimension_semantics = [#tpu.dimension_semantics<parallel>], iteration_bounds = array<i64: 2>, scalar_prefetch = 0 : i64, scratch_operands = 0 : i64, tpu.core_type = #tpu.core_type<tc>, window_params = [{transform_indices = @transform_0, window_bounds = array<i64: 8, 32>}, {pipeline_mode = #tpu.pipeline_mode<synchronous>, transform_indices = @transform_1, window_bounds = array<i64: 32, 64>}, {pipeline_mode = #tpu.pipeline_mode<synchronous>, transform_indices = @transform_2, window_bounds = array<i64: 1, 64>}, {pipeline_mode = #tpu.pipeline_mode<synchronous>, transform_indices = @transform_3, window_bounds = array<i64: 64, 64>}, {pipeline_mode = #tpu.pipeline_mode<synchronous>, transform_indices = @transform_4, window_bounds = array<i64: 1, 64>}, {pipeline_mode = #tpu.pipeline_mode<synchronous>, transform_indices = @transform_5, window_bounds = array<i64: 64, 16>}, {pipeline_mode = #tpu.pipeline_mode<synchronous>, transform_indices = @transform_6, window_bounds = array<i64: 1, 16>}, {transform_indices = @transform_7, window_bounds = array<i64: 8, 16>}]} {
    %c0 = arith.constant 0 : index
    %c0_0 = arith.constant 0 : index
    %0 = vector.load %arg1[%c0, %c0_0] : memref<8x32xf32, #tpu.memory_space<vmem>>, vector<8x32xf32>
    %1 = arith.truncf %0 : vector<8x32xf32> to vector<8x32xbf16>
    %c0_1 = arith.constant 0 : index
    %c0_2 = arith.constant 0 : index
    %2 = vector.load %arg2[%c0_1, %c0_2] : memref<32x64xbf16, #tpu.memory_space<vmem>>, vector<32x64xbf16>
    %cst = arith.constant dense<0.000000e+00> : vector<8x64xf32>
    %3 = tpu.matmul %1, %2, %cst {dimension_numbers = #tpu.dot_dimension_numbers<[1], [0], [0], [1], [0, 0, 1, 1], [], []>} : vector<8x32xbf16>, vector<32x64xbf16>, vector<8x64xf32> -> vector<8x64xf32>
    %c0_3 = arith.constant 0 : index
    %c0_4 = arith.constant 0 : index
    %4 = vector.load %arg3[%c0_3, %c0_4] : memref<1x64xf32, #tpu.memory_space<vmem>>, vector<1x64xf32>
    %5 = vector.broadcast %4 : vector<1x64xf32> to vector<8x64xf32>
    %6 = arith.addf %3, %5 : vector<8x64xf32>
    %cst_5 = arith.constant 0.000000e+00 : f32
    %7 = vector.broadcast %cst_5 : f32 to vector<8x64xf32>
    %8 = arith.maximumf %6, %7 : vector<8x64xf32>
    %9 = arith.truncf %8 : vector<8x64xf32> to vector<8x64xbf16>
    %c0_6 = arith.constant 0 : index
    %c0_7 = arith.constant 0 : index
    %10 = vector.load %arg4[%c0_6, %c0_7] : memref<64x64xbf16, #tpu.memory_space<vmem>>, vector<64x64xbf16>
    %cst_8 = arith.constant dense<0.000000e+00> : vector<8x64xf32>
    %11 = tpu.matmul %9, %10, %cst_8 {dimension_numbers = #tpu.dot_dimension_numbers<[1], [0], [0], [1], [0, 0, 1, 1], [], []>} : vector<8x64xbf16>, vector<64x64xbf16>, vector<8x64xf32> -> vector<8x64xf32>
    %c0_9 = arith.constant 0 : index
    %c0_10 = arith.constant 0 : index
    %12 = vector.load %arg5[%c0_9, %c0_10] : memref<1x64xf32, #tpu.memory_space<vmem>>, vector<1x64xf32>
    %13 = vector.broadcast %12 : vector<1x64xf32> to vector<8x64xf32>
    %14 = arith.addf %11, %13 : vector<8x64xf32>
    %cst_11 = arith.constant 0.000000e+00 : f32
    %15 = vector.broadcast %cst_11 : f32 to vector<8x64xf32>
    %16 = arith.maximumf %14, %15 : vector<8x64xf32>
    %17 = arith.truncf %16 : vector<8x64xf32> to vector<8x64xbf16>
    %c0_12 = arith.constant 0 : index
    %c0_13 = arith.constant 0 : index
    %18 = vector.load %arg6[%c0_12, %c0_13] : memref<64x16xbf16, #tpu.memory_space<vmem>>, vector<64x16xbf16>
    %cst_14 = arith.constant dense<0.000000e+00> : vector<8x16xf32>
    %19 = tpu.matmul %17, %18, %cst_14 {dimension_numbers = #tpu.dot_dimension_numbers<[1], [0], [0], [1], [0, 0, 1, 1], [], []>} : vector<8x64xbf16>, vector<64x16xbf16>, vector<8x16xf32> -> vector<8x16xf32>
    %c0_15 = arith.constant 0 : index
    %c0_16 = arith.constant 0 : index
    %20 = vector.load %arg7[%c0_15, %c0_16] : memref<1x16xf32, #tpu.memory_space<vmem>>, vector<1x16xf32>
    %21 = vector.broadcast %20 : vector<1x16xf32> to vector<8x16xf32>
    %22 = arith.addf %19, %21 : vector<8x16xf32>
    %c0_17 = arith.constant 0 : index
    %c0_18 = arith.constant 0 : index
    %23 = vector.load %arg8[%c0_17, %c0_18] : memref<8x16xf32, #tpu.memory_space<vmem>>, vector<8x16xf32>
    tpu.vector_store %arg8[%c0_17, %c0_18], %22 {strides = array<i32>} : memref<8x16xf32, #tpu.memory_space<vmem>>, vector<8x16xf32>,
    return
  }
  func.func @transform_0(%arg0: i32) -> (i32, i32) {
    %c0_i32 = arith.constant 0 : i32
    %c0_i32_0 = arith.constant 0 : i32
    return %arg0, %c0_i32 : i32, i32
  }
  func.func @transform_1(%arg0: i32) -> (i32, i32) {
    %c0_i32 = arith.constant 0 : i32
    %c0_i32_0 = arith.constant 0 : i32
    %c0_i32_1 = arith.constant 0 : i32
    return %c0_i32, %c0_i32_0 : i32, i32
  }
  func.func @transform_2(%arg0: i32) -> (i32, i32) {
    %c0_i32 = arith.constant 0 : i32
    %c0_i32_0 = arith.constant 0 : i32
    %c0_i32_1 = arith.constant 0 : i32
    return %c0_i32, %c0_i32_0 : i32, i32
  }
  func.func @transform_3(%arg0: i32) -> (i32, i32) {
    %c0_i32 = arith.constant 0 : i32
    %c0_i32_0 = arith.constant 0 : i32
    %c0_i32_1 = arith.constant 0 : i32
    return %c0_i32, %c0_i32_0 : i32, i32
  }
  func.func @transform_4(%arg0: i32) -> (i32, i32) {
    %c0_i32 = arith.constant 0 : i32
    %c0_i32_0 = arith.constant 0 : i32
    %c0_i32_1 = arith.constant 0 : i32
    return %c0_i32, %c0_i32_0 : i32, i32
  }
  func.func @transform_5(%arg0: i32) -> (i32, i32) {
    %c0_i32 = arith.constant 0 : i32
    %c0_i32_0 = arith.constant 0 : i32
    %c0_i32_1 = arith.constant 0 : i32
    return %c0_i32, %c0_i32_0 : i32, i32
  }
  func.func @transform_6(%arg0: i32) -> (i32, i32) {
    %c0_i32 = arith.constant 0 : i32
    %c0_i32_0 = arith.constant 0 : i32
    %c0_i32_1 = arith.constant 0 : i32
    return %c0_i32, %c0_i32_0 : i32, i32
  }
  func.func @transform_7(%arg0: i32) -> (i32, i32) {
    %c0_i32 = arith.constant 0 : i32
    %c0_i32_0 = arith.constant 0 : i32
    return %arg0, %c0_i32 : i32, i32
  }
}

</mosaic_0001>

<llo_original>
// kernel: tpu_custom_call.1
$region0: #{tpu_custom_call.1}
  #allocation0 [shape = 'u32[]', space=smem, size = 0x4, offset = 0x4, fixed_abs, tag = 'smem constant byte address 0x4 - core index']
  #allocation1 [shape = 'u32[144,128]{1,0:T(1,128)}', space=vmem, size = 0x12000, scoped, tag = 'internal scratch']
  %s0 = inlined_call_operand.vmem [shape: f32[16,32], index: 0, kind: input, shape index: {}]
  %s1 = inlined_call_operand.hbm [shape: bf16[32,64], index: 1, kind: input, shape index: {}]
  %s2 = inlined_call_operand.vmem [shape: f32[1,64], index: 2, kind: input, shape index: {}]
  %s3 = inlined_call_operand.vmem [shape: bf16[64,64], index: 3, kind: input, shape index: {}]
  %s4 = inlined_call_operand.vmem [shape: f32[1,64], index: 4, kind: input, shape index: {}]
  %s5 = inlined_call_operand.vmem [shape: bf16[64,16], index: 5, kind: input, shape index: {}]
  %s6 = inlined_call_operand.vmem [shape: f32[1,16], index: 6, kind: input, shape index: {}]
  %s7 = inlined_call_operand.hbm [shape: f32[16,16], index: 7, kind: output, shape index: {}]
  %s8 = sld [smem:[#allocation0]]
  $region65: #{tpu_custom_call.1} parent=0
    _
  %s10 = ssub.s32 1, %s8
  %s11 = scalar_select 0, %s10, %s8
  $region1: #{tpu_custom_call.1} parent=0
    #allocation2 [shape = 'u8[8192]{0}', space=vmem, size = 0x2000, scoped, tag = 'input window, operand 1, single buffered']
    #allocation3 [shape = 's32[2]{0}', space=sflag, size = 0x8, scoped, tag = 'scoped memory for tpu_custom_call.1']
    #allocation4 [shape = 's32[2]{0}', space=sflag, size = 0x8, scoped, tag = 'scoped memory for tpu_custom_call.1']
    #allocation5 [shape = 'u8[8192]{0}', space=vmem, size = 0x2000, scoped, tag = 'output window, operand 0']
    %12 = vsyncpa [#allocation3], 0
    %13 = vsyncpa [#allocation4], 0
    %s14 = scalar_lea.sflag [#allocation4], 1
    %15 = vsyncpa %s14, 0
    loop: start=0, step=1, limit=4
    $region2: #{tpu_custom_call.1} parent=1 // loop_pre_header
      _
    $region3: #{tpu_custom_call.1} parent=1 // loop_header
      %s17 = sphi 0, %s21
      %p18 = scmp.ge.s32.totalorder %s17, 4
      %s27 = sphi 0, %s29
      %s30 = sphi 0, %s27
      %s31 = sphi 0, %s30
      %s47 = sphi 0, %s31
      %s51 = sphi 0, %s51
      %s53 = sphi 0, %s51
      %s54 = sphi 0, %s53
      %s68 = sphi 0, %s54
      %s72 = sphi 0, %s72
      %s74 = sphi 0, %s72
      %s75 = sphi 0, %s74
      %s89 = sphi 0, %s75
      %s93 = sphi 0, %s93
      %s95 = sphi 0, %s93
      %s96 = sphi 0, %s95
      %s110 = sphi 0, %s96
      %s114 = sphi 0, %s114
      %s116 = sphi 0, %s114
      %s117 = sphi 0, %s116
      %s131 = sphi 0, %s117
      %s135 = sphi 0, %s135
      %s137 = sphi 0, %s135
      %s138 = sphi 0, %s137
      %s152 = sphi 0, %s138
      %s156 = sphi 0, %s156
      %s158 = sphi 0, %s156
      %s159 = sphi 0, %s158
      %s173 = sphi 0, %s159
      %s179 = sphi 0, %s181
      %s182 = sphi 0, %s179
      %s183 = sphi 0, %s182
      %s199 = sphi 0, %s183
    $region4: #{tpu_custom_call.1} parent=1 // loop_header_branch
      %20 = sbr.rel (%p18) target = $region8
    $region5: #{tpu_custom_call.1} parent=1 // loop_body
      %s22 = ssub.s32 %s17, 1
      %s23 = ssub.s32 %s17, 2
      %s24 = sadd.s32 %s17, 1
      %s25 = ssub.s32 %s17, %s24
      %p26 = scmp.eq.s32.totalorder %s25, 0
      %s28 = sadd.s32 %s27, 1
      %s29 = scalar_select %p26, %s27, %s28
      %p32 = pneg %p26
      %p33 = scmp.eq.s32.totalorder %s17, 1
      %p34 = por %p32, %p33
      %p35 = scmp.ne.s32.totalorder %s27, %s30
      %p36 = scmp.eq.s32.totalorder %s17, 0
      %p37 = por %p35, %p36
      %p38 = scmp.ne.s32.totalorder %s27, %s30
      %p39 = scmp.eq.s32.totalorder %s22, 1
      %p40 = por %p38, %p39
      %p41 = scmp.ne.s32.totalorder %s30, %s31
      %p42 = scmp.eq.s32.totalorder %s22, 0
      %p43 = por %p41, %p42
      %p44 = scmp.ne.s32.totalorder %s30, %s31
      %p45 = scmp.eq.s32.totalorder %s23, 1
      %p46 = por %p44, %p45
      %p48 = scmp.ne.s32.totalorder %s31, %s47
      %p49 = scmp.eq.s32.totalorder %s23, 0
      %p50 = por %p48, %p49
      %s52 = sadd.s32 %s51, 1
      %p55 = scmp.eq.s32.totalorder %s17, 1
      %p56 = scmp.ne.s32.totalorder %s51, %s53
      %p57 = scmp.eq.s32.totalorder %s17, 0
      %p58 = por %p56, %p57
      %p59 = scmp.ne.s32.totalorder %s51, %s53
      %p60 = scmp.eq.s32.totalorder %s22, 1
      %p61 = por %p59, %p60
      %p62 = scmp.ne.s32.totalorder %s53, %s54
      %p63 = scmp.eq.s32.totalorder %s22, 0
      %p64 = por %p62, %p63
      %p65 = scmp.ne.s32.totalorder %s53, %s54
      %p66 = scmp.eq.s32.totalorder %s23, 1
      %p67 = por %p65, %p66
      %p69 = scmp.ne.s32.totalorder %s54, %s68
      %p70 = scmp.eq.s32.totalorder %s23, 0
      %p71 = por %p69, %p70
      %s73 = sadd.s32 %s72, 1
      %p76 = scmp.eq.s32.totalorder %s17, 1
      %p77 = scmp.ne.s32.totalorder %s72, %s74
      %p78 = scmp.eq.s32.totalorder %s17, 0
      %p79 = por %p77, %p78
      %p80 = scmp.ne.s32.totalorder %s72, %s74
      %p81 = scmp.eq.s32.totalorder %s22, 1
      %p82 = por %p80, %p81
      %p83 = scmp.ne.s32.totalorder %s74, %s75
      %p84 = scmp.eq.s32.totalorder %s22, 0
      %p85 = por %p83, %p84
      %p86 = scmp.ne.s32.totalorder %s74, %s75
      %p87 = scmp.eq.s32.totalorder %s23, 1
      %p88 = por %p86, %p87
      %p90 = scmp.ne.s32.totalorder %s75, %s89
      %p91 = scmp.eq.s32.totalorder %s23, 0
      %p92 = por %p90, %p91
      %s94 = sadd.s32 %s93, 1
      %p97 = scmp.eq.s32.totalorder %s17, 1
      %p98 = scmp.ne.s32.totalorder %s93, %s95
      %p99 = scmp.eq.s32.totalorder %s17, 0
      %p100 = por %p98, %p99
      %p101 = scmp.ne.s32.totalorder %s93, %s95
      %p102 = scmp.eq.s32.totalorder %s22, 1
      %p103 = por %p101, %p102
      %p104 = scmp.ne.s32.totalorder %s95, %s96
      %p105 = scmp.eq.s32.totalorder %s22, 0
      %p106 = por %p104, %p105
      %p107 = scmp.ne.s32.totalorder %s95, %s96
      %p108 = scmp.eq.s32.totalorder %s23, 1
      %p109 = por %p107, %p108
      %p111 = scmp.ne.s32.totalorder %s96, %s110
      %p112 = scmp.eq.s32.totalorder %s23, 0
      %p113 = por %p111, %p112
      %s115 = sadd.s32 %s114, 1
      %p118 = scmp.eq.s32.totalorder %s17, 1
      %p119 = scmp.ne.s32.totalorder %s114, %s116
      %p120 = scmp.eq.s32.totalorder %s17, 0
      %p121 = por %p119, %p120
      %p122 = scmp.ne.s32.totalorder %s114, %s116
      %p123 = scmp.eq.s32.totalorder %s22, 1
      %p124 = por %p122, %p123
      %p125 = scmp.ne.s32.totalorder %s116, %s117
      %p126 = scmp.eq.s32.totalorder %s22, 0
      %p127 = por %p125, %p126
      %p128 = scmp.ne.s32.totalorder %s116, %s117
      %p129 = scmp.eq.s32.totalorder %s23, 1
      %p130 = por %p128, %p129
      %p132 = scmp.ne.s32.totalorder %s117, %s131
      %p133 = scmp.eq.s32.totalorder %s23, 0
      %p134 = por %p132, %p133
      %s136 = sadd.s32 %s135, 1
      %p139 = scmp.eq.s32.totalorder %s17, 1
      %p140 = scmp.ne.s32.totalorder %s135, %s137
      %p141 = scmp.eq.s32.totalorder %s17, 0
      %p142 = por %p140, %p141
      %p143 = scmp.ne.s32.totalorder %s135, %s137
      %p144 = scmp.eq.s32.totalorder %s22, 1
      %p145 = por %p143, %p144
      %p146 = scmp.ne.s32.totalorder %s137, %s138
      %p147 = scmp.eq.s32.totalorder %s22, 0
      %p148 = por %p146, %p147
      %p149 = scmp.ne.s32.totalorder %s137, %s138
      %p150 = scmp.eq.s32.totalorder %s23, 1
      %p151 = por %p149, %p150
      %p153 = scmp.ne.s32.totalorder %s138, %s152
      %p154 = scmp.eq.s32.totalorder %s23, 0
      %p155 = por %p153, %p154
      %s157 = sadd.s32 %s156, 1
      %p160 = scmp.eq.s32.totalorder %s17, 1
      %p161 = scmp.ne.s32.totalorder %s156, %s158
      %p162 = scmp.eq.s32.totalorder %s17, 0
      %p163 = por %p161, %p162
      %p164 = scmp.ne.s32.totalorder %s156, %s158
      %p165 = scmp.eq.s32.totalorder %s22, 1
      %p166 = por %p164, %p165
      %p167 = scmp.ne.s32.totalorder %s158, %s159
      %p168 = scmp.eq.s32.totalorder %s22, 0
      %p169 = por %p167, %p168
      %p170 = scmp.ne.s32.totalorder %s158, %s159
      %p171 = scmp.eq.s32.totalorder %s23, 1
      %p172 = por %p170, %p171
      %p174 = scmp.ne.s32.totalorder %s159, %s173
      %p175 = scmp.eq.s32.totalorder %s23, 0
      %p176 = por %p174, %p175
      %s177 = ssub.s32 %s17, %s24
      %p178 = scmp.eq.s32.totalorder %s177, 0
      %s180 = sadd.s32 %s179, 1
      %s181 = scalar_select %p178, %s179, %s180
      %p184 = pneg %p178
      %p185 = scmp.eq.s32.totalorder %s17, 1
      %p186 = por %p184, %p185
      %p187 = scmp.ne.s32.totalorder %s179, %s182
      %p188 = scmp.eq.s32.totalorder %s17, 0
      %p189 = por %p187, %p188
      %p190 = scmp.ne.s32.totalorder %s179, %s182
      %p191 = scmp.eq.s32.totalorder %s22, 1
      %p192 = por %p190, %p191
      %p193 = scmp.ne.s32.totalorder %s182, %s183
      %p194 = scmp.eq.s32.totalorder %s22, 0
      %p195 = por %p193, %p194
      %p196 = scmp.ne.s32.totalorder %s182, %s183
      %p197 = scmp.eq.s32.totalorder %s23, 1
      %p198 = por %p196, %p197
      %p200 = scmp.ne.s32.totalorder %s183, %s199
      %p201 = scmp.eq.s32.totalorder %s23, 0
      %p202 = por %p200, %p201
      %p203 = scmp.le.s32.totalorder 1, %s17
      %p204 = scmp.lt.s32.totalorder %s17, 3
      %p205 = pnand %p203, %p204
      %p206 = pneg %p205
      // Predicated region
      $region9: #{tpu_custom_call.1} parent=5 // pred_check
        _
      $region10: #{tpu_custom_call.1} parent=5 // pred_check_branch
        %208 = sbr.rel (%p205) target = $region12
      $region11: #{tpu_custom_call.1} parent=5 // pred_region
        %s209 = ssub.s32 %s17, 1
        // Predicated region
        $region13: #{tpu_custom_call.1} parent=11 // pred_check
          %p210 = pneg %p64
        $region14: #{tpu_custom_call.1} parent=11 // pred_check_branch
          %212 = sbr.rel (%p210) target = $region16
        $region15: #{tpu_custom_call.1} parent=11 // pred_region
          %s214 = ssub.s32 256, 256
          %215 = vsyncadd [#allocation3], %s214
          %s216 = sshll.u32 [#allocation2], 4
          %s217 = int_to_ptr.vmem [resolvable:$true] %s216
          %222 = dma.hbm_to_vmem [thread:$0]  %s1, 256, %s217, [#allocation3], 64, 64, 4
        $region16: #{tpu_custom_call.1} parent=11 // pred_fallthru
          _
        // Predicated region
        $region17: #{tpu_custom_call.1} parent=11 // pred_check
          %p223 = pneg %p85
        $region18: #{tpu_custom_call.1} parent=11 // pred_check_branch
          %225 = sbr.rel (%p223) target = $region20
        $region19: #{tpu_custom_call.1} parent=11 // pred_region
          _
        $region20: #{tpu_custom_call.1} parent=11 // pred_fallthru
          _
        // Predicated region
        $region21: #{tpu_custom_call.1} parent=11 // pred_check
          %p226 = pneg %p106
        $region22: #{tpu_custom_call.1} parent=11 // pred_check_branch
          %228 = sbr.rel (%p226) target = $region24
        $region23: #{tpu_custom_call.1} parent=11 // pred_region
          _
        $region24: #{tpu_custom_call.1} parent=11 // pred_fallthru
          _
        // Predicated region
        $region25: #{tpu_custom_call.1} parent=11 // pred_check
          %p229 = pneg %p127
        $region26: #{tpu_custom_call.1} parent=11 // pred_check_branch
          %231 = sbr.rel (%p229) target = $region28
        $region27: #{tpu_custom_call.1} parent=11 // pred_region
          _
        $region28: #{tpu_custom_call.1} parent=11 // pred_fallthru
          _
        // Predicated region
        $region29: #{tpu_custom_call.1} parent=11 // pred_check
          %p232 = pneg %p148
        $region30: #{tpu_custom_call.1} parent=11 // pred_check_branch
          %234 = sbr.rel (%p232) target = $region32
        $region31: #{tpu_custom_call.1} parent=11 // pred_region
          _
        $region32: #{tpu_custom_call.1} parent=11 // pred_fallthru
          _
        // Predicated region
        $region33: #{tpu_custom_call.1} parent=11 // pred_check
          %p235 = pneg %p169
        $region34: #{tpu_custom_call.1} parent=11 // pred_check_branch
          %237 = sbr.rel (%p235) target = $region36
        $region35: #{tpu_custom_call.1} parent=11 // pred_region
          _
        $region36: #{tpu_custom_call.1} parent=11 // pred_fallthru
          _
      $region12: #{tpu_custom_call.1} parent=5 // pred_fallthru
        _
      %p238 = scmp.lt.s32.totalorder %s17, 2
      // Predicated region
      $region37: #{tpu_custom_call.1} parent=5 // pred_check
        %p239 = pneg %p238
      $region38: #{tpu_custom_call.1} parent=5 // pred_check_branch
        %241 = sbr.rel (%p239) target = $region40
      $region39: #{tpu_custom_call.1} parent=5 // pred_region
        // Predicated region
        $region41: #{tpu_custom_call.1} parent=39 // pred_check
          %p242 = pneg %p37
        $region42: #{tpu_custom_call.1} parent=39 // pred_check_branch
          %244 = sbr.rel (%p242) target = $region44
        $region43: #{tpu_custom_call.1} parent=39 // pred_region
          %p245 = scmp.lt.s32.totalorder %s17, 1
          %s246 = scalar_select %p245, %s17, 1
          %s247 = smul.addr %s246, 8
          %s248 = scalar_lea.vmem %s0, %s247
        $region44: #{tpu_custom_call.1} parent=39 // pred_fallthru
          _
      $region40: #{tpu_custom_call.1} parent=5 // pred_fallthru
        _
      %p249 = scmp.le.s32.totalorder 1, %s17
      %p250 = scmp.lt.s32.totalorder %s17, 3
      %p251 = pnand %p249, %p250
      %p252 = pneg %p251
      // Predicated region
      $region45: #{tpu_custom_call.1} parent=5 // pred_check
        _
      $region46: #{tpu_custom_call.1} parent=5 // pred_check_branch
        %254 = sbr.rel (%p251) target = $region48
      $region47: #{tpu_custom_call.1} parent=5 // pred_region
        %s255 = ssub.s32 %s17, 1
        // Predicated region
        $region49: #{tpu_custom_call.1} parent=47 // pred_check
          %p256 = pneg %p64
        $region50: #{tpu_custom_call.1} parent=47 // pred_check_branch
          %258 = sbr.rel (%p256) target = $region52
        $region51: #{tpu_custom_call.1} parent=47 // pred_region
          %259 = dma.done [#allocation3], 256
        $region52: #{tpu_custom_call.1} parent=47 // pred_fallthru
          _
        %p260 = scmp.lt.s32.totalorder %s22, 1
        %s261 = scalar_select %p260, %s22, 1
        %s262 = smul.addr %s261, 8
        %s263 = scalar_lea.vmem %s0, %s262
        %p264 = pneg %p43
        %p265 = pneg %p40
        %p266 = pneg %p64
        %p267 = pneg %p61
        %p268 = pneg %p85
        %p269 = pneg %p82
        %p270 = pneg %p106
        %p271 = pneg %p103
        %p272 = pneg %p127
        %p273 = pneg %p124
        %p274 = pneg %p148
        %p275 = pneg %p145
        %p276 = pneg %p169
        %p277 = pneg %p166
        %p278 = pneg %p195
        %p279 = pneg %p192
        %s280 = sand.u32 %s182, 1
        %s281 = scalar_lea.sflag [#allocation4], %s280
        %s282 = sand.u32 %s182, 1
        %s283 = smul.addr %s282, 8
        %s284 = scalar_lea.vmem [#allocation5], %s283
        %p285 = scmp.lt.s32.totalorder %s22, 1
        %s286 = scalar_select %p285, %s22, 1
        %s287 = smul.addr %s286, 8
        %s288 = scalar_lea.vmem %s0, %s287
        %v290 = vld [vmem:[%s288] sm:$0xff]
        %v291 = vpack.c.bf16 %v290, %v290
        %v292 = vld [vmem:[#allocation2] sm:$0xf]
        %v293 = vld [vmem:[#allocation2 + $0x4] sm:$0xf]
        %v294 = vld [vmem:[#allocation2 + $0x8] sm:$0xf]
        %v295 = vld [vmem:[#allocation2 + $0xc] sm:$0xf]
        %v296 = vld [vmem:[%s2] sm:$0x1]
        %v298 = vlaneseq
        %v299 = vshrl.u32 %v298, 7
        %v300 = vsub.s32 0, %v299
        %v301 = vrot.slane %v296, %v300
        %v307 = vunpack.c.l.b16 %v292
        %v308 = vunpack.c.l.b16 %v293
        %v309 = vunpack.c.l.b16 %v294
        %v310 = vunpack.c.l.b16 %v295
        %v311 = vpack.c.b16 %v308, %v307
        %v312 = vpack.c.b16 %v310, %v309
        %vm315 = vcmask 261120
        %v317 = vsel %vm315, %v291, 0
        %319 = vmatprep.subr.bf16.mxu0 0
        %320 = vmatpush1.bf16.msra.mxu0 %v311
        %321 = vmatprep.subr.bf16.mxu0 0
        %322 = vmatpush1.bf16.msra.mxu0 %v312
        %323 = vmatprep.subr.bf16.mxu0 0
        %324 = vmatpush1.bf16.msra.mxu0 0
        %325 = vmatprep.subr.bf16.mxu0 0
        %326 = vmatpush1.bf16.msra.mxu0 0
        %327 = vmatprep.subr.bf16.mxu0 0
        %328 = vmatpush1.bf16.msra.mxu0 0
        %329 = vmatprep.subr.bf16.mxu0 0
        %330 = vmatpush1.bf16.msra.mxu0 0
        %331 = vmatprep.subr.bf16.mxu0 0
        %332 = vmatpush1.bf16.msra.mxu0 0
        %333 = vmatprep.subr.bf16.mxu0 0
        %334 = vmatpush1.bf16.msra.mxu0 0
        %335 = vmatprep.subr.bf16.mxu0 0
        %336 = vmatpush1.bf16.msra.mxu0 0
        %337 = vmatprep.subr.bf16.mxu0 0
        %338 = vmatpush1.bf16.msra.mxu0 0
        %339 = vmatprep.subr.bf16.mxu0 0
        %340 = vmatpush1.bf16.msra.mxu0 0
        %341 = vmatprep.subr.bf16.mxu0 0
        %342 = vmatpush1.bf16.msra.mxu0 0
        %343 = vmatprep.subr.bf16.mxu0 0
        %344 = vmatpush1.bf16.msra.mxu0 0
        %345 = vmatprep.subr.bf16.mxu0 0
        %346 = vmatpush1.bf16.msra.mxu0 0
        %347 = vmatprep.subr.bf16.mxu0 0
        %348 = vmatpush1.bf16.msra.mxu0 0
        %349 = vmatprep.subr.bf16.mxu0 0
        %350 = vmatpush1.bf16.msra.mxu0 0
        %351 = vmatprep.mubr.bf16.mxu0 0
        %352 = vmatmul.mubr.bf16.gmra.mrb[0].mxu0 %v317
        %v353 = vpop.f32.mrb[0].mxu0
        %v354 = vadd.f32 %v301, %v353
        %v355 = vpop.f32.mrb[0].mxu0
        %v356 = vpop.f32.mrb[0].mxu0
        %v357 = vpop.f32.mrb[0].mxu0
        %358 = vdwg.mxu0
        %v359 = vmax.f32 %v354, 0.0
        %v360 = vpack.c.bf16 %v359, %v359
        %v361 = vld [vmem:[%s3] sm:$0xf]
        %v362 = vld [vmem:[%s3 + $0x4] sm:$0xf]
        %v363 = vld [vmem:[%s3 + $0x8] sm:$0xf]
        %v364 = vld [vmem:[%s3 + $0xc] sm:$0xf]
        %v365 = vld [vmem:[%s3 + $0x10] sm:$0xf]
        %v366 = vld [vmem:[%s3 + $0x14] sm:$0xf]
        %v367 = vld [vmem:[%s3 + $0x18] sm:$0xf]
        %v368 = vld [vmem:[%s3 + $0x1c] sm:$0xf]
        %v369 = vld [vmem:[%s4] sm:$0x1]
        %v371 = vlaneseq
        %v372 = vshrl.u32 %v371, 7
        %v373 = vsub.s32 0, %v372
        %v374 = vrot.slane %v369, %v373
        %v384 = vunpack.c.l.b16 %v361
        %v385 = vunpack.c.l.b16 %v362
        %v386 = vunpack.c.l.b16 %v363
        %v387 = vunpack.c.l.b16 %v364
        %v388 = vunpack.c.l.b16 %v365
        %v389 = vunpack.c.l.b16 %v366
        %v390 = vunpack.c.l.b16 %v367
        %v391 = vunpack.c.l.b16 %v368
        %v392 = vpack.c.b16 %v385, %v384
        %v393 = vpack.c.b16 %v387, %v386
        %v394 = vpack.c.b16 %v389, %v388
        %v395 = vpack.c.b16 %v391, %v390
        %vm400 = vcmask 523264
        %v402 = vsel %vm400, %v360, 0
        %404 = vmatprep.subr.bf16.mxu0 0
        %405 = vmatpush1.bf16.msra.mxu0 %v392
        %406 = vmatprep.subr.bf16.mxu0 0
        %407 = vmatpush1.bf16.msra.mxu0 %v393
        %408 = vmatprep.subr.bf16.mxu0 0
        %409 = vmatpush1.bf16.msra.mxu0 %v394
        %410 = vmatprep.subr.bf16.mxu0 0
        %411 = vmatpush1.bf16.msra.mxu0 %v395
        %412 = vmatprep.subr.bf16.mxu0 0
        %413 = vmatpush1.bf16.msra.mxu0 0
        %414 = vmatprep.subr.bf16.mxu0 0
        %415 = vmatpush1.bf16.msra.mxu0 0
        %416 = vmatprep.subr.bf16.mxu0 0
        %417 = vmatpush1.bf16.msra.mxu0 0
        %418 = vmatprep.subr.bf16.mxu0 0
        %419 = vmatpush1.bf16.msra.mxu0 0
        %420 = vmatprep.subr.bf16.mxu0 0
        %421 = vmatpush1.bf16.msra.mxu0 0
        %422 = vmatprep.subr.bf16.mxu0 0
        %423 = vmatpush1.bf16.msra.mxu0 0
        %424 = vmatprep.subr.bf16.mxu0 0
        %425 = vmatpush1.bf16.msra.mxu0 0
        %426 = vmatprep.subr.bf16.mxu0 0
        %427 = vmatpush1.bf16.msra.mxu0 0
        %428 = vmatprep.subr.bf16.mxu0 0
        %429 = vmatpush1.bf16.msra.mxu0 0
        %430 = vmatprep.subr.bf16.mxu0 0
        %431 = vmatpush1.bf16.msra.mxu0 0
        %432 = vmatprep.subr.bf16.mxu0 0
        %433 = vmatpush1.bf16.msra.mxu0 0
        %434 = vmatprep.subr.bf16.mxu0 0
        %435 = vmatpush1.bf16.msra.mxu0 0
        %436 = vmatprep.mubr.bf16.mxu0 0
        %437 = vmatmul.mubr.bf16.gmra.mrb[0].mxu0 %v402
        %v438 = vpop.f32.mrb[0].mxu0
        %v439 = vadd.f32 %v374, %v438
        %v440 = vpop.f32.mrb[0].mxu0
        %v441 = vpop.f32.mrb[0].mxu0
        %v442 = vpop.f32.mrb[0].mxu0
        %443 = vdwg.mxu0
        %v444 = vmax.f32 %v439, 0.0
        %v445 = vpack.c.bf16 %v444, %v444
        %v446 = vld [vmem:[%s5] sm:$0xf]
        %v447 = vld [vmem:[%s5 + $0x4] sm:$0xf]
        %v448 = vld [vmem:[%s5 + $0x8] sm:$0xf]
        %v449 = vld [vmem:[%s5 + $0xc] sm:$0xf]
        %v450 = vld [vmem:[%s5 + $0x10] sm:$0xf]
        %v451 = vld [vmem:[%s5 + $0x14] sm:$0xf]
        %v452 = vld [vmem:[%s5 + $0x18] sm:$0xf]
        %v453 = vld [vmem:[%s5 + $0x1c] sm:$0xf]
        %v454 = vld [vmem:[%s6] sm:$0x1]
        %v456 = vlaneseq
        %v457 = vshrl.u32 %v456, 7
        %v458 = vsub.s32 0, %v457
        %v459 = vrot.slane %v454, %v458
        %v469 = vunpack.c.l.b16 %v446
        %v470 = vunpack.c.l.b16 %v447
        %v471 = vunpack.c.l.b16 %v448
        %v472 = vunpack.c.l.b16 %v449
        %v473 = vunpack.c.l.b16 %v450
        %v474 = vunpack.c.l.b16 %v451
        %v475 = vunpack.c.l.b16 %v452
        %v476 = vunpack.c.l.b16 %v453
        %v477 = vpack.c.b16 %v470, %v469
        %v478 = vpack.c.b16 %v472, %v471
        %v479 = vpack.c.b16 %v474, %v473
        %v480 = vpack.c.b16 %v476, %v475
        %v486 = vsel %vm400, %v445, 0
        %488 = vmatprep.subr.bf16.mxu0 0
        %489 = vmatpush1.bf16.msra.mxu0 %v477
        %490 = vmatprep.subr.bf16.mxu0 0
        %491 = vmatpush1.bf16.msra.mxu0 %v478
        %492 = vmatprep.subr.bf16.mxu0 0
        %493 = vmatpush1.bf16.msra.mxu0 %v479
        %494 = vmatprep.subr.bf16.mxu0 0
        %495 = vmatpush1.bf16.msra.mxu0 %v480
        %496 = vmatprep.subr.bf16.mxu0 0
        %497 = vmatpush1.bf16.msra.mxu0 0
        %498 = vmatprep.subr.bf16.mxu0 0
        %499 = vmatpush1.bf16.msra.mxu0 0
        %500 = vmatprep.subr.bf16.mxu0 0
        %501 = vmatpush1.bf16.msra.mxu0 0
        %502 = vmatprep.subr.bf16.mxu0 0
        %503 = vmatpush1.bf16.msra.mxu0 0
        %504 = vmatprep.subr.bf16.mxu0 0
        %505 = vmatpush1.bf16.msra.mxu0 0
        %506 = vmatprep.subr.bf16.mxu0 0
        %507 = vmatpush1.bf16.msra.mxu0 0
        %508 = vmatprep.subr.bf16.mxu0 0
        %509 = vmatpush1.bf16.msra.mxu0 0
        %510 = vmatprep.subr.bf16.mxu0 0
        %511 = vmatpush1.bf16.msra.mxu0 0
        %512 = vmatprep.subr.bf16.mxu0 0
        %513 = vmatpush1.bf16.msra.mxu0 0
        %514 = vmatprep.subr.bf16.mxu0 0
        %515 = vmatpush1.bf16.msra.mxu0 0
        %516 = vmatprep.subr.bf16.mxu0 0
        %517 = vmatpush1.bf16.msra.mxu0 0
        %518 = vmatprep.subr.bf16.mxu0 0
        %519 = vmatpush1.bf16.msra.mxu0 0
        %520 = vmatprep.mubr.bf16.mxu0 0
        %521 = vmatmul.mubr.bf16.gmra.mrb[0].mxu0 %v486
        %v522 = vpop.f32.mrb[0].mxu0
        %v523 = vadd.f32 %v459, %v522
        %v524 = vpop.f32.mrb[0].mxu0
        %v525 = vpop.f32.mrb[0].mxu0
        %v526 = vpop.f32.mrb[0].mxu0
        %527 = vdwg.mxu0
        %vm528 = vcmask 130048
        %529 = vst.msk [vmem:[%s284] sm:$0xff] %vm528, %v523
        %s530 = sand.u32 %s182, 1
        %s531 = scalar_lea.sflag [#allocation4], %s530
        %s532 = sand.u32 %s182, 1
        %s533 = smul.addr %s532, 8
        %s534 = scalar_lea.vmem [#allocation5], %s533
        // Predicated region
        $region53: #{tpu_custom_call.1} parent=47 // pred_check
          %p535 = pneg %p192
        $region54: #{tpu_custom_call.1} parent=47 // pred_check_branch
          %537 = sbr.rel (%p535) target = $region56
        $region55: #{tpu_custom_call.1} parent=47 // pred_region
          %s539 = ssub.s32 128, 128
          %540 = vsyncadd %s531, %s539
          %s541 = smul.addr %s22, 128
          %s542 = scalar_lea.hbm %s7, %s541
          %s544 = sshll.u32 %s534, 4
          %s545 = int_to_ptr.vmem [resolvable:$true] %s544
          %547 = dma.vmem_to_hbm [thread:$0]  %s545, 128, %s542, %s531
        $region56: #{tpu_custom_call.1} parent=47 // pred_fallthru
          _
      $region48: #{tpu_custom_call.1} parent=5 // pred_fallthru
        _
      %p548 = scmp.le.s32.totalorder 2, %s17
      // Predicated region
      $region57: #{tpu_custom_call.1} parent=5 // pred_check
        %p549 = pneg %p548
      $region58: #{tpu_custom_call.1} parent=5 // pred_check_branch
        %551 = sbr.rel (%p549) target = $region60
      $region59: #{tpu_custom_call.1} parent=5 // pred_region
        %s552 = ssub.s32 %s17, 2
        // Predicated region
        $region61: #{tpu_custom_call.1} parent=59 // pred_check
          %p553 = pneg %p198
        $region62: #{tpu_custom_call.1} parent=59 // pred_check_branch
          %555 = sbr.rel (%p553) target = $region64
        $region63: #{tpu_custom_call.1} parent=59 // pred_region
          %s556 = sand.u32 %s183, 1
          %s557 = scalar_lea.sflag [#allocation4], %s556
          %s558 = sand.u32 %s183, 1
          %s559 = smul.addr %s558, 8
          %s560 = scalar_lea.vmem [#allocation5], %s559
          %561 = dma.done %s557, 128
        $region64: #{tpu_custom_call.1} parent=59 // pred_fallthru
          _
      $region60: #{tpu_custom_call.1} parent=5 // pred_fallthru
        _
    $region6: #{tpu_custom_call.1} parent=1 // loop_footer
      %s21 = sadd.s32 1, %s17
    $region7: #{tpu_custom_call.1} parent=1 // loop_footer_branch
      %16 = sbr.rel target = $region3
    $region8: #{tpu_custom_call.1} parent=1 // loop_exit
      _
    %562 = vsyncpa [#allocation3], 1
    %s563 = scalar_lea.sflag [#allocation3], 1
    %564 = vsyncpa %s563, 1
    %565 = vsyncpa [#allocation4], 1
    %s566 = scalar_lea.sflag [#allocation4], 1
    %567 = vsyncpa %s566, 1

// kernel: tpu_custom_call.1
$region0: #{tpu_custom_call.1}
  #allocation0 [shape = 'u32[]', space=smem, size = 0x4, offset = 0x4, fixed_abs, tag = 'smem constant byte address 0x4 - core index']
  #allocation1 [shape = 'u32[144,128]{1,0:T(1,128)}', space=vmem, size = 0x12000, scoped, tag = 'internal scratch']
  %s0 = inlined_call_operand.vmem [shape: f32[16,32], index: 0, kind: input, shape index: {}]
  %s1 = inlined_call_operand.hbm [shape: bf16[32,64], index: 1, kind: input, shape index: {}]
  %s2 = inlined_call_operand.vmem [shape: f32[1,64], index: 2, kind: input, shape index: {}]
  %s3 = inlined_call_operand.vmem [shape: bf16[64,64], index: 3, kind: input, shape index: {}]
  %s4 = inlined_call_operand.vmem [shape: f32[1,64], index: 4, kind: input, shape index: {}]
  %s5 = inlined_call_operand.vmem [shape: bf16[64,16], index: 5, kind: input, shape index: {}]
  %s6 = inlined_call_operand.vmem [shape: f32[1,16], index: 6, kind: input, shape index: {}]
  %s7 = inlined_call_operand.hbm [shape: f32[16,16], index: 7, kind: output, shape index: {}]
  %s8 = sld [smem:[#allocation0]]
  $region65: #{tpu_custom_call.1} parent=0
    _
  %s10 = ssub.s32 1, %s8
  %s11 = scalar_select 0, %s10, %s8
  $region1: #{tpu_custom_call.1} parent=0
    #allocation2 [shape = 'u8[8192]{0}', space=vmem, size = 0x2000, scoped, tag = 'input window, operand 1, single buffered']
    #allocation3 [shape = 's32[2]{0}', space=sflag, size = 0x8, scoped, tag = 'scoped memory for tpu_custom_call.1']
    #allocation4 [shape = 's32[2]{0}', space=sflag, size = 0x8, scoped, tag = 'scoped memory for tpu_custom_call.1']
    #allocation5 [shape = 'u8[8192]{0}', space=vmem, size = 0x2000, scoped, tag = 'output window, operand 0']
    %12 = vsyncpa [#allocation3], 0
    %13 = vsyncpa [#allocation4], 0
    %s14 = scalar_lea.sflag [#allocation4], 1
    %15 = vsyncpa %s14, 0
    loop: start=0, step=1, limit=4
    $region2: #{tpu_custom_call.1} parent=1 // loop_pre_header
      _
    $region3: #{tpu_custom_call.1} parent=1 // loop_header
      %s17 = sphi 0, %s21
      %p18 = scmp.ge.s32.totalorder %s17, 4
      %s27 = sphi 0, %s29
      %s30 = sphi 0, %s27
      %s31 = sphi 0, %s30
      %s47 = sphi 0, %s31
      %s51 = sphi 0, %s51
      %s53 = sphi 0, %s51
      %s54 = sphi 0, %s53
      %s68 = sphi 0, %s54
      %s72 = sphi 0, %s72
      %s74 = sphi 0, %s72
      %s75 = sphi 0, %s74
      %s89 = sphi 0, %s75
      %s93 = sphi 0, %s93
      %s95 = sphi 0, %s93
      %s96 = sphi 0, %s95
      %s110 = sphi 0, %s96
      %s114 = sphi 0, %s114
      %s116 = sphi 0, %s114
      %s117 = sphi 0, %s116
      %s131 = sphi 0, %s117
      %s135 = sphi 0, %s135
      %s137 = sphi 0, %s135
      %s138 = sphi 0, %s137
      %s152 = sphi 0, %s138
      %s156 = sphi 0, %s156
      %s158 = sphi 0, %s156
      %s159 = sphi 0, %s158
      %s173 = sphi 0, %s159
      %s179 = sphi 0, %s181
      %s182 = sphi 0, %s179
      %s183 = sphi 0, %s182
      %s199 = sphi 0, %s183
    $region4: #{tpu_custom_call.1} parent=1 // loop_header_branch
      %20 = sbr.rel (%p18) target = $region8
    $region5: #{tpu_custom_call.1} parent=1 // loop_body
      %s22 = ssub.s32 %s17, 1
      %s23 = ssub.s32 %s17, 2
      %s24 = sadd.s32 %s17, 1
      %s25 = ssub.s32 %s17, %s24
      %p26 = scmp.eq.s32.totalorder %s25, 0
      %s28 = sadd.s32 %s27, 1
      %s29 = scalar_select %p26, %s27, %s28
      %p32 = pneg %p26
      %p33 = scmp.eq.s32.totalorder %s17, 1
      %p34 = por %p32, %p33
      %p35 = scmp.ne.s32.totalorder %s27, %s30
      %p36 = scmp.eq.s32.totalorder %s17, 0
      %p37 = por %p35, %p36
      %p38 = scmp.ne.s32.totalorder %s27, %s30
      %p39 = scmp.eq.s32.totalorder %s22, 1
      %p40 = por %p38, %p39
      %p41 = scmp.ne.s32.totalorder %s30, %s31
      %p42 = scmp.eq.s32.totalorder %s22, 0
      %p43 = por %p41, %p42
      %p44 = scmp.ne.s32.totalorder %s30, %s31
      %p45 = scmp.eq.s32.totalorder %s23, 1
      %p46 = por %p44, %p45
      %p48 = scmp.ne.s32.totalorder %s31, %s47
      %p49 = scmp.eq.s32.totalorder %s23, 0
      %p50 = por %p48, %p49
      %s52 = sadd.s32 %s51, 1
      %p55 = scmp.eq.s32.totalorder %s17, 1
      %p56 = scmp.ne.s32.totalorder %s51, %s53
      %p57 = scmp.eq.s32.totalorder %s17, 0
      %p58 = por %p56, %p57
      %p59 = scmp.ne.s32.totalorder %s51, %s53
      %p60 = scmp.eq.s32.totalorder %s22, 1
      %p61 = por %p59, %p60
      %p62 = scmp.ne.s32.totalorder %s53, %s54
      %p63 = scmp.eq.s32.totalorder %s22, 0
      %p64 = por %p62, %p63
      %p65 = scmp.ne.s32.totalorder %s53, %s54
      %p66 = scmp.eq.s32.totalorder %s23, 1
      %p67 = por %p65, %p66
      %p69 = scmp.ne.s32.totalorder %s54, %s68
      %p70 = scmp.eq.s32.totalorder %s23, 0
      %p71 = por %p69, %p70
      %s73 = sadd.s32 %s72, 1
      %p76 = scmp.eq.s32.totalorder %s17, 1
      %p77 = scmp.ne.s32.totalorder %s72, %s74
      %p78 = scmp.eq.s32.totalorder %s17, 0
      %p79 = por %p77, %p78
      %p80 = scmp.ne.s32.totalorder %s72, %s74
      %p81 = scmp.eq.s32.totalorder %s22, 1
      %p82 = por %p80, %p81
      %p83 = scmp.ne.s32.totalorder %s74, %s75
      %p84 = scmp.eq.s32.totalorder %s22, 0
      %p85 = por %p83, %p84
      %p86 = scmp.ne.s32.totalorder %s74, %s75
      %p87 = scmp.eq.s32.totalorder %s23, 1
      %p88 = por %p86, %p87
      %p90 = scmp.ne.s32.totalorder %s75, %s89
      %p91 = scmp.eq.s32.totalorder %s23, 0
      %p92 = por %p90, %p91
      %s94 = sadd.s32 %s93, 1
      %p97 = scmp.eq.s32.totalorder %s17, 1
      %p98 = scmp.ne.s32.totalorder %s93, %s95
      %p99 = scmp.eq.s32.totalorder %s17, 0
      %p100 = por %p98, %p99
      %p101 = scmp.ne.s32.totalorder %s93, %s95
      %p102 = scmp.eq.s32.totalorder %s22, 1
      %p103 = por %p101, %p102
      %p104 = scmp.ne.s32.totalorder %s95, %s96
      %p105 = scmp.eq.s32.totalorder %s22, 0
      %p106 = por %p104, %p105
      %p107 = scmp.ne.s32.totalorder %s95, %s96
      %p108 = scmp.eq.s32.totalorder %s23, 1
      %p109 = por %p107, %p108
      %p111 = scmp.ne.s32.totalorder %s96, %s110
      %p112 = scmp.eq.s32.totalorder %s23, 0
      %p113 = por %p111, %p112
      %s115 = sadd.s32 %s114, 1
      %p118 = scmp.eq.s32.totalorder %s17, 1
      %p119 = scmp.ne.s32.totalorder %s114, %s116
      %p120 = scmp.eq.s32.totalorder %s17, 0
      %p121 = por %p119, %p120
      %p122 = scmp.ne.s32.totalorder %s114, %s116
      %p123 = scmp.eq.s32.totalorder %s22, 1
      %p124 = por %p122, %p123
      %p125 = scmp.ne.s32.totalorder %s116, %s117
      %p126 = scmp.eq.s32.totalorder %s22, 0
      %p127 = por %p125, %p126
      %p128 = scmp.ne.s32.totalorder %s116, %s117
      %p129 = scmp.eq.s32.totalorder %s23, 1
      %p130 = por %p128, %p129
      %p132 = scmp.ne.s32.totalorder %s117, %s131
      %p133 = scmp.eq.s32.totalorder %s23, 0
      %p134 = por %p132, %p133
      %s136 = sadd.s32 %s135, 1
      %p139 = scmp.eq.s32.totalorder %s17, 1
      %p140 = scmp.ne.s32.totalorder %s135, %s137
      %p141 = scmp.eq.s32.totalorder %s17, 0
      %p142 = por %p140, %p141
      %p143 = scmp.ne.s32.totalorder %s135, %s137
      %p144 = scmp.eq.s32.totalorder %s22, 1
      %p145 = por %p143, %p144
      %p146 = scmp.ne.s32.totalorder %s137, %s138
      %p147 = scmp.eq.s32.totalorder %s22, 0
      %p148 = por %p146, %p147
      %p149 = scmp.ne.s32.totalorder %s137, %s138
      %p150 = scmp.eq.s32.totalorder %s23, 1
      %p151 = por %p149, %p150
      %p153 = scmp.ne.s32.totalorder %s138, %s152
      %p154 = scmp.eq.s32.totalorder %s23, 0
      %p155 = por %p153, %p154
      %s157 = sadd.s32 %s156, 1
      %p160 = scmp.eq.s32.totalorder %s17, 1
      %p161 = scmp.ne.s32.totalorder %s156, %s158
      %p162 = scmp.eq.s32.totalorder %s17, 0
      %p163 = por %p161, %p162
      %p164 = scmp.ne.s32.totalorder %s156, %s158
      %p165 = scmp.eq.s32.totalorder %s22, 1
      %p166 = por %p164, %p165
      %p167 = scmp.ne.s32.totalorder %s158, %s159
      %p168 = scmp.eq.s32.totalorder %s22, 0
      %p169 = por %p167, %p168
      %p170 = scmp.ne.s32.totalorder %s158, %s159
      %p171 = scmp.eq.s32.totalorder %s23, 1
      %p172 = por %p170, %p171
      %p174 = scmp.ne.s32.totalorder %s159, %s173
      %p175 = scmp.eq.s32.totalorder %s23, 0
      %p176 = por %p174, %p175
      %s177 = ssub.s32 %s17, %s24
      %p178 = scmp.eq.s32.totalorder %s177, 0
      %s180 = sadd.s32 %s179, 1
      %s181 = scalar_select %p178, %s179, %s180
      %p184 = pneg %p178
      %p185 = scmp.eq.s32.totalorder %s17, 1
      %p186 = por %p184, %p185
      %p187 = scmp.ne.s32.totalorder %s179, %s182
      %p188 = scmp.eq.s32.totalorder %s17, 0
      %p189 = por %p187, %p188
      %p190 = scmp.ne.s32.totalorder %s179, %s182
      %p191 = scmp.eq.s32.totalorder %s22, 1
      %p192 = por %p190, %p191
      %p193 = scmp.ne.s32.totalorder %s182, %s183
      %p194 = scmp.eq.s32.totalorder %s22, 0
      %p195 = por %p193, %p194
      %p196 = scmp.ne.s32.totalorder %s182, %s183
      %p197 = scmp.eq.s32.totalorder %s23, 1
      %p198 = por %p196, %p197
      %p200 = scmp.ne.s32.totalorder %s183, %s199
      %p201 = scmp.eq.s32.totalorder %s23, 0
      %p202 = por %p200, %p201
      %p203 = scmp.le.s32.totalorder 1, %s17
      %p204 = scmp.lt.s32.totalorder %s17, 3
      %p205 = pnand %p203, %p204
      %p206 = pneg %p205
      // Predicated region
      $region9: #{tpu_custom_call.1} parent=5 // pred_check
        _
      $region10: #{tpu_custom_call.1} parent=5 // pred_check_branch
        %208 = sbr.rel (%p205) target = $region12
      $region11: #{tpu_custom_call.1} parent=5 // pred_region
        %s209 = ssub.s32 %s17, 1
        // Predicated region
        $region13: #{tpu_custom_call.1} parent=11 // pred_check
          %p210 = pneg %p64
        $region14: #{tpu_custom_call.1} parent=11 // pred_check_branch
          %212 = sbr.rel (%p210) target = $region16
        $region15: #{tpu_custom_call.1} parent=11 // pred_region
          %s214 = ssub.s32 256, 256
          %215 = vsyncadd [#allocation3], %s214
          %s216 = sshll.u32 [#allocation2], 4
          %s217 = int_to_ptr.vmem [resolvable:$true] %s216
          %222 = dma.hbm_to_vmem [thread:$0]  %s1, 256, %s217, [#allocation3], 64, 64, 4
        $region16: #{tpu_custom_call.1} parent=11 // pred_fallthru
          _
        // Predicated region
        $region17: #{tpu_custom_call.1} parent=11 // pred_check
          %p223 = pneg %p85
        $region18: #{tpu_custom_call.1} parent=11 // pred_check_branch
          %225 = sbr.rel (%p223) target = $region20
        $region19: #{tpu_custom_call.1} parent=11 // pred_region
          _
        $region20: #{tpu_custom_call.1} parent=11 // pred_fallthru
          _
        // Predicated region
        $region21: #{tpu_custom_call.1} parent=11 // pred_check
          %p226 = pneg %p106
        $region22: #{tpu_custom_call.1} parent=11 // pred_check_branch
          %228 = sbr.rel (%p226) target = $region24
        $region23: #{tpu_custom_call.1} parent=11 // pred_region
          _
        $region24: #{tpu_custom_call.1} parent=11 // pred_fallthru
          _
        // Predicated region
        $region25: #{tpu_custom_call.1} parent=11 // pred_check
          %p229 = pneg %p127
        $region26: #{tpu_custom_call.1} parent=11 // pred_check_branch
          %231 = sbr.rel (%p229) target = $region28
        $region27: #{tpu_custom_call.1} parent=11 // pred_region
          _
        $region28: #{tpu_custom_call.1} parent=11 // pred_fallthru
          _
        // Predicated region
        $region29: #{tpu_custom_call.1} parent=11 // pred_check
          %p232 = pneg %p148
        $region30: #{tpu_custom_call.1} parent=11 // pred_check_branch
          %234 = sbr.rel (%p232) target = $region32
        $region31: #{tpu_custom_call.1} parent=11 // pred_region
          _
        $region32: #{tpu_custom_call.1} parent=11 // pred_fallthru
          _
        // Predicated region
        $region33: #{tpu_custom_call.1} parent=11 // pred_check
          %p235 = pneg %p169
        $region34: #{tpu_custom_call.1} parent=11 // pred_check_branch
          %237 = sbr.rel (%p235) target = $region36
        $region35: #{tpu_custom_call.1} parent=11 // pred_region
          _
        $region36: #{tpu_custom_call.1} parent=11 // pred_fallthru
          _
      $region12: #{tpu_custom_call.1} parent=5 // pred_fallthru
        _
      %p238 = scmp.lt.s32.totalorder %s17, 2
      // Predicated region
      $region37: #{tpu_custom_call.1} parent=5 // pred_check
        %p239 = pneg %p238
      $region38: #{tpu_custom_call.1} parent=5 // pred_check_branch
        %241 = sbr.rel (%p239) target = $region40
      $region39: #{tpu_custom_call.1} parent=5 // pred_region
        // Predicated region
        $region41: #{tpu_custom_call.1} parent=39 // pred_check
          %p242 = pneg %p37
        $region42: #{tpu_custom_call.1} parent=39 // pred_check_branch
          %244 = sbr.rel (%p242) target = $region44
        $region43: #{tpu_custom_call.1} parent=39 // pred_region
          %p245 = scmp.lt.s32.totalorder %s17, 1
          %s246 = scalar_select %p245, %s17, 1
          %s247 = smul.addr %s246, 8
          %s248 = scalar_lea.vmem %s0, %s247
        $region44: #{tpu_custom_call.1} parent=39 // pred_fallthru
          _
      $region40: #{tpu_custom_call.1} parent=5 // pred_fallthru
        _
      %p249 = scmp.le.s32.totalorder 1, %s17
      %p250 = scmp.lt.s32.totalorder %s17, 3
      %p251 = pnand %p249, %p250
      %p252 = pneg %p251
      // Predicated region
      $region45: #{tpu_custom_call.1} parent=5 // pred_check
        _
      $region46: #{tpu_custom_call.1} parent=5 // pred_check_branch
        %254 = sbr.rel (%p251) target = $region48
      $region47: #{tpu_custom_call.1} parent=5 // pred_region
        %s255 = ssub.s32 %s17, 1
        // Predicated region
        $region49: #{tpu_custom_call.1} parent=47 // pred_check
          %p256 = pneg %p64
        $region50: #{tpu_custom_call.1} parent=47 // pred_check_branch
          %258 = sbr.rel (%p256) target = $region52
        $region51: #{tpu_custom_call.1} parent=47 // pred_region
          %259 = dma.done [#allocation3], 256
        $region52: #{tpu_custom_call.1} parent=47 // pred_fallthru
          _
        %p260 = scmp.lt.s32.totalorder %s22, 1
        %s261 = scalar_select %p260, %s22, 1
        %s262 = smul.addr %s261, 8
        %s263 = scalar_lea.vmem %s0, %s262
        %p264 = pneg %p43
        %p265 = pneg %p40
        %p266 = pneg %p64
        %p267 = pneg %p61
        %p268 = pneg %p85
        %p269 = pneg %p82
        %p270 = pneg %p106
        %p271 = pneg %p103
        %p272 = pneg %p127
        %p273 = pneg %p124
        %p274 = pneg %p148
        %p275 = pneg %p145
        %p276 = pneg %p169
        %p277 = pneg %p166
        %p278 = pneg %p195
        %p279 = pneg %p192
        %s280 = sand.u32 %s182, 1
        %s281 = scalar_lea.sflag [#allocation4], %s280
        %s282 = sand.u32 %s182, 1
        %s283 = smul.addr %s282, 8
        %s284 = scalar_lea.vmem [#allocation5], %s283
        %p285 = scmp.lt.s32.totalorder %s22, 1
        %s286 = scalar_select %p285, %s22, 1
        %s287 = smul.addr %s286, 8
        %s288 = scalar_lea.vmem %s0, %s287
        %v290 = vld [vmem:[%s288] sm:$0xff]
        %v291 = vpack.c.bf16 %v290, %v290
        %v292 = vld [vmem:[#allocation2] sm:$0xf]
        %v293 = vld [vmem:[#allocation2 + $0x4] sm:$0xf]
        %v294 = vld [vmem:[#allocation2 + $0x8] sm:$0xf]
        %v295 = vld [vmem:[#allocation2 + $0xc] sm:$0xf]
        %v296 = vld [vmem:[%s2] sm:$0x1]
        %v298 = vlaneseq
        %v299 = vshrl.u32 %v298, 7
        %v300 = vsub.s32 0, %v299
        %v301 = vrot.slane %v296, %v300
        %v307 = vunpack.c.l.b16 %v292
        %v308 = vunpack.c.l.b16 %v293
        %v309 = vunpack.c.l.b16 %v294
        %v310 = vunpack.c.l.b16 %v295
        %v311 = vpack.c.b16 %v308, %v307
        %v312 = vpack.c.b16 %v310, %v309
        %vm315 = vcmask 261120
        %v317 = vsel %vm315, %v291, 0
        %319 = vmatprep.subr.bf16.mxu0 0
        %320 = vmatpush1.bf16.msra.mxu0 %v311
        %321 = vmatprep.subr.bf16.mxu0 0
        %322 = vmatpush1.bf16.msra.mxu0 %v312
        %323 = vmatprep.subr.bf16.mxu0 0
        %324 = vmatpush1.bf16.msra.mxu0 0
        %325 = vmatprep.subr.bf16.mxu0 0
        %326 = vmatpush1.bf16.msra.mxu0 0
        %327 = vmatprep.subr.bf16.mxu0 0
        %328 = vmatpush1.bf16.msra.mxu0 0
        %329 = vmatprep.subr.bf16.mxu0 0
        %330 = vmatpush1.bf16.msra.mxu0 0
        %331 = vmatprep.subr.bf16.mxu0 0
        %332 = vmatpush1.bf16.msra.mxu0 0
        %333 = vmatprep.subr.bf16.mxu0 0
        %334 = vmatpush1.bf16.msra.mxu0 0
        %335 = vmatprep.subr.bf16.mxu0 0
        %336 = vmatpush1.bf16.msra.mxu0 0
        %337 = vmatprep.subr.bf16.mxu0 0
        %338 = vmatpush1.bf16.msra.mxu0 0
        %339 = vmatprep.subr.bf16.mxu0 0
        %340 = vmatpush1.bf16.msra.mxu0 0
        %341 = vmatprep.subr.bf16.mxu0 0
        %342 = vmatpush1.bf16.msra.mxu0 0
        %343 = vmatprep.subr.bf16.mxu0 0
        %344 = vmatpush1.bf16.msra.mxu0 0
        %345 = vmatprep.subr.bf16.mxu0 0
        %346 = vmatpush1.bf16.msra.mxu0 0
        %347 = vmatprep.subr.bf16.mxu0 0
        %348 = vmatpush1.bf16.msra.mxu0 0
        %349 = vmatprep.subr.bf16.mxu0 0
        %350 = vmatpush1.bf16.msra.mxu0 0
        %351 = vmatprep.mubr.bf16.mxu0 0
        %352 = vmatmul.mubr.bf16.gmra.mrb[0].mxu0 %v317
        %v353 = vpop.f32.mrb[0].mxu0
        %v354 = vadd.f32 %v301, %v353
        %v355 = vpop.f32.mrb[0].mxu0
        %v356 = vpop.f32.mrb[0].mxu0
        %v357 = vpop.f32.mrb[0].mxu0
        %358 = vdwg.mxu0
        %v359 = vmax.f32 %v354, 0.0
        %v360 = vpack.c.bf16 %v359, %v359
        %v361 = vld [vmem:[%s3] sm:$0xf]
        %v362 = vld [vmem:[%s3 + $0x4] sm:$0xf]
        %v363 = vld [vmem:[%s3 + $0x8] sm:$0xf]
        %v364 = vld [vmem:[%s3 + $0xc] sm:$0xf]
        %v365 = vld [vmem:[%s3 + $0x10] sm:$0xf]
        %v366 = vld [vmem:[%s3 + $0x14] sm:$0xf]
        %v367 = vld [vmem:[%s3 + $0x18] sm:$0xf]
        %v368 = vld [vmem:[%s3 + $0x1c] sm:$0xf]
        %v369 = vld [vmem:[%s4] sm:$0x1]
        %v371 = vlaneseq
        %v372 = vshrl.u32 %v371, 7
        %v373 = vsub.s32 0, %v372
        %v374 = vrot.slane %v369, %v373
        %v384 = vunpack.c.l.b16 %v361
        %v385 = vunpack.c.l.b16 %v362
        %v386 = vunpack.c.l.b16 %v363
        %v387 = vunpack.c.l.b16 %v364
        %v388 = vunpack.c.l.b16 %v365
        %v389 = vunpack.c.l.b16 %v366
        %v390 = vunpack.c.l.b16 %v367
        %v391 = vunpack.c.l.b16 %v368
        %v392 = vpack.c.b16 %v385, %v384
        %v393 = vpack.c.b16 %v387, %v386
        %v394 = vpack.c.b16 %v389, %v388
        %v395 = vpack.c.b16 %v391, %v390
        %vm400 = vcmask 523264
        %v402 = vsel %vm400, %v360, 0
        %404 = vmatprep.subr.bf16.mxu0 0
        %405 = vmatpush1.bf16.msra.mxu0 %v392
        %406 = vmatprep.subr.bf16.mxu0 0
        %407 = vmatpush1.bf16.msra.mxu0 %v393
        %408 = vmatprep.subr.bf16.mxu0 0
        %409 = vmatpush1.bf16.msra.mxu0 %v394
        %410 = vmatprep.subr.bf16.mxu0 0
        %411 = vmatpush1.bf16.msra.mxu0 %v395
        %412 = vmatprep.subr.bf16.mxu0 0
        %413 = vmatpush1.bf16.msra.mxu0 0
        %414 = vmatprep.subr.bf16.mxu0 0
        %415 = vmatpush1.bf16.msra.mxu0 0
        %416 = vmatprep.subr.bf16.mxu0 0
        %417 = vmatpush1.bf16.msra.mxu0 0
        %418 = vmatprep.subr.bf16.mxu0 0
        %419 = vmatpush1.bf16.msra.mxu0 0
        %420 = vmatprep.subr.bf16.mxu0 0
        %421 = vmatpush1.bf16.msra.mxu0 0
        %422 = vmatprep.subr.bf16.mxu0 0
        %423 = vmatpush1.bf16.msra.mxu0 0
        %424 = vmatprep.subr.bf16.mxu0 0
        %425 = vmatpush1.bf16.msra.mxu0 0
        %426 = vmatprep.subr.bf16.mxu0 0
        %427 = vmatpush1.bf16.msra.mxu0 0
        %428 = vmatprep.subr.bf16.mxu0 0
        %429 = vmatpush1.bf16.msra.mxu0 0
        %430 = vmatprep.subr.bf16.mxu0 0
        %431 = vmatpush1.bf16.msra.mxu0 0
        %432 = vmatprep.subr.bf16.mxu0 0
        %433 = vmatpush1.bf16.msra.mxu0 0
        %434 = vmatprep.subr.bf16.mxu0 0
        %435 = vmatpush1.bf16.msra.mxu0 0
        %436 = vmatprep.mubr.bf16.mxu0 0
        %437 = vmatmul.mubr.bf16.gmra.mrb[0].mxu0 %v402
        %v438 = vpop.f32.mrb[0].mxu0
        %v439 = vadd.f32 %v374, %v438
        %v440 = vpop.f32.mrb[0].mxu0
        %v441 = vpop.f32.mrb[0].mxu0
        %v442 = vpop.f32.mrb[0].mxu0
        %443 = vdwg.mxu0
        %v444 = vmax.f32 %v439, 0.0
        %v445 = vpack.c.bf16 %v444, %v444
        %v446 = vld [vmem:[%s5] sm:$0xf]
        %v447 = vld [vmem:[%s5 + $0x4] sm:$0xf]
        %v448 = vld [vmem:[%s5 + $0x8] sm:$0xf]
        %v449 = vld [vmem:[%s5 + $0xc] sm:$0xf]
        %v450 = vld [vmem:[%s5 + $0x10] sm:$0xf]
        %v451 = vld [vmem:[%s5 + $0x14] sm:$0xf]
        %v452 = vld [vmem:[%s5 + $0x18] sm:$0xf]
        %v453 = vld [vmem:[%s5 + $0x1c] sm:$0xf]
        %v454 = vld [vmem:[%s6] sm:$0x1]
        %v456 = vlaneseq
        %v457 = vshrl.u32 %v456, 7
        %v458 = vsub.s32 0, %v457
        %v459 = vrot.slane %v454, %v458
        %v469 = vunpack.c.l.b16 %v446
        %v470 = vunpack.c.l.b16 %v447
        %v471 = vunpack.c.l.b16 %v448
        %v472 = vunpack.c.l.b16 %v449
        %v473 = vunpack.c.l.b16 %v450
        %v474 = vunpack.c.l.b16 %v451
        %v475 = vunpack.c.l.b16 %v452
        %v476 = vunpack.c.l.b16 %v453
        %v477 = vpack.c.b16 %v470, %v469
        %v478 = vpack.c.b16 %v472, %v471
        %v479 = vpack.c.b16 %v474, %v473
        %v480 = vpack.c.b16 %v476, %v475
        %v486 = vsel %vm400, %v445, 0
        %488 = vmatprep.subr.bf16.mxu0 0
        %489 = vmatpush1.bf16.msra.mxu0 %v477
        %490 = vmatprep.subr.bf16.mxu0 0
        %491 = vmatpush1.bf16.msra.mxu0 %v478
        %492 = vmatprep.subr.bf16.mxu0 0
        %493 = vmatpush1.bf16.msra.mxu0 %v479
        %494 = vmatprep.subr.bf16.mxu0 0
        %495 = vmatpush1.bf16.msra.mxu0 %v480
        %496 = vmatprep.subr.bf16.mxu0 0
        %497 = vmatpush1.bf16.msra.mxu0 0
        %498 = vmatprep.subr.bf16.mxu0 0
        %499 = vmatpush1.bf16.msra.mxu0 0
        %500 = vmatprep.subr.bf16.mxu0 0
        %501 = vmatpush1.bf16.msra.mxu0 0
        %502 = vmatprep.subr.bf16.mxu0 0
        %503 = vmatpush1.bf16.msra.mxu0 0
        %504 = vmatprep.subr.bf16.mxu0 0
        %505 = vmatpush1.bf16.msra.mxu0 0
        %506 = vmatprep.subr.bf16.mxu0 0
        %507 = vmatpush1.bf16.msra.mxu0 0
        %508 = vmatprep.subr.bf16.mxu0 0
        %509 = vmatpush1.bf16.msra.mxu0 0
        %510 = vmatprep.subr.bf16.mxu0 0
        %511 = vmatpush1.bf16.msra.mxu0 0
        %512 = vmatprep.subr.bf16.mxu0 0
        %513 = vmatpush1.bf16.msra.mxu0 0
        %514 = vmatprep.subr.bf16.mxu0 0
        %515 = vmatpush1.bf16.msra.mxu0 0
        %516 = vmatprep.subr.bf16.mxu0 0
        %517 = vmatpush1.bf16.msra.mxu0 0
        %518 = vmatprep.subr.bf16.mxu0 0
        %519 = vmatpush1.bf16.msra.mxu0 0
        %520 = vmatprep.mubr.bf16.mxu0 0
        %521 = vmatmul.mubr.bf16.gmra.mrb[0].mxu0 %v486
        %v522 = vpop.f32.mrb[0].mxu0
        %v523 = vadd.f32 %v459, %v522
        %v524 = vpop.f32.mrb[0].mxu0
        %v525 = vpop.f32.mrb[0].mxu0
        %v526 = vpop.f32.mrb[0].mxu0
        %527 = vdwg.mxu0
        %vm528 = vcmask 130048
        %529 = vst.msk [vmem:[%s284] sm:$0xff] %vm528, %v523
        %s530 = sand.u32 %s182, 1
        %s531 = scalar_lea.sflag [#allocation4], %s530
        %s532 = sand.u32 %s182, 1
        %s533 = smul.addr %s532, 8
        %s534 = scalar_lea.vmem [#allocation5], %s533
        // Predicated region
        $region53: #{tpu_custom_call.1} parent=47 // pred_check
          %p535 = pneg %p192
        $region54: #{tpu_custom_call.1} parent=47 // pred_check_branch
          %537 = sbr.rel (%p535) target = $region56
        $region55: #{tpu_custom_call.1} parent=47 // pred_region
          %s539 = ssub.s32 128, 128
          %540 = vsyncadd %s531, %s539
          %s541 = smul.addr %s22, 128
          %s542 = scalar_lea.hbm %s7, %s541
          %s544 = sshll.u32 %s534, 4
          %s545 = int_to_ptr.vmem [resolvable:$true] %s544
          %547 = dma.vmem_to_hbm [thread:$0]  %s545, 128, %s542, %s531
        $region56: #{tpu_custom_call.1} parent=47 // pred_fallthru
          _
      $region48: #{tpu_custom_call.1} parent=5 // pred_fallthru
        _
      %p548 = scmp.le.s32.totalorder 2, %s17
      // Predicated region
      $region57: #{tpu_custom_call.1} parent=5 // pred_check
        %p549 = pneg %p548
      $region58: #{tpu_custom_call.1} parent=5 // pred_check_branch
        %551 = sbr.rel (%p549) target = $region60
      $region59: #{tpu_custom_call.1} parent=5 // pred_region
        %s552 = ssub.s32 %s17, 2
        // Predicated region
        $region61: #{tpu_custom_call.1} parent=59 // pred_check
          %p553 = pneg %p198
        $region62: #{tpu_custom_call.1} parent=59 // pred_check_branch
          %555 = sbr.rel (%p553) target = $region64
        $region63: #{tpu_custom_call.1} parent=59 // pred_region
          %s556 = sand.u32 %s183, 1
          %s557 = scalar_lea.sflag [#allocation4], %s556
          %s558 = sand.u32 %s183, 1
          %s559 = smul.addr %s558, 8
          %s560 = scalar_lea.vmem [#allocation5], %s559
          %561 = dma.done %s557, 128
        $region64: #{tpu_custom_call.1} parent=59 // pred_fallthru
          _
      $region60: #{tpu_custom_call.1} parent=5 // pred_fallthru
        _
    $region6: #{tpu_custom_call.1} parent=1 // loop_footer
      %s21 = sadd.s32 1, %s17
    $region7: #{tpu_custom_call.1} parent=1 // loop_footer_branch
      %16 = sbr.rel target = $region3
    $region8: #{tpu_custom_call.1} parent=1 // loop_exit
      _
    %562 = vsyncpa [#allocation3], 1
    %s563 = scalar_lea.sflag [#allocation3], 1
    %564 = vsyncpa %s563, 1
    %565 = vsyncpa [#allocation4], 1
    %s566 = scalar_lea.sflag [#allocation4], 1
    %567 = vsyncpa %s566, 1

</llo_original>
